<compile_context>
chip_gen: v6e
topology: v6e:2x2x1
jax: 0.10.0
libtpu: 0.0.40
codegen_flags: <defaults>
</compile_context>

<pallas_src>
import functools
import math

import jax
import jax.numpy as jnp
from jax.experimental import pallas as pl
from jax.experimental.pallas import tpu as pltpu

LANES = 128


def _ve_matmul_kernel(x_ref, p_ref, o_ref):
    # x_ref: (TG, 128*V)  lane-dense feature tile (contiguous HBM burst).
    # p_ref: (128*V, 128) resident weighted-scatter matrix P[l*V+v, l'] = w[v]*d(l,l').
    # o_ref: (TG, 128)    lane-dense output rows (direct MXU result layout).
    x = x_ref[...].astype(p_ref.dtype)          # identity for f32/bf16 inputs
    o_ref[...] = jnp.dot(
        x, p_ref[...], preferred_element_type=jnp.float32
    ).astype(o_ref.dtype)


def _prefer_two_steps():
    # v7x (and v4) expose two TensorCores per device; keep >= 2 "parallel" grid
    # steps there so both cores get work.  Single-TC v5e/v6e prefer fewer,
    # larger steps (less per-step overhead).
    try:
        kind = jax.devices()[0].device_kind.lower()
    except Exception:
        return False
    return ("v7" in kind) or ("v4" in kind)


def _choose_tile_groups(num_groups, bytes_per_group):
    # ~6 MiB of raw feature data per grid step: the ~0.35us per-step overhead is
    # <10% of the tile's DMA time on all generations, and with double-buffered
    # input/output plus the resident P operand we stay far below the 48 MiB
    # VMEM limit requested below (v7x physical VMEM = 64 MiB).
    target_bytes = 6 * 1024 * 1024
    tg = max(8, (target_bytes // bytes_per_group) // 8 * 8)
    if _prefer_two_steps() and num_groups >= 16:
        tg = min(tg, max(8, (num_groups // 2) // 8 * 8))
    return min(tg, num_groups)


@functools.partial(jax.jit, static_argnames=("tile_groups",))
def view_ensemble(features, weight, tile_groups=None):
    """features: (B, F, V), weight: (V, 1) -> (B, F).  Matches torch bmm+squeeze."""
    B, F, V = features.shape
    assert weight.shape == (V, 1)
    M = B * F

    compute_dtype = jnp.bfloat16 if features.dtype == jnp.bfloat16 else jnp.float32

    # Tiny weighted-scatter matrix: applies the view weights AND places each
    # reduced (b,f) element on its own lane in one MXU pass.
    w = weight.reshape(V).astype(jnp.float32)
    P = jnp.eye(LANES, dtype=jnp.float32)[:, None, :] * w[None, :, None]  # (128,V,128)
    P = P.reshape(LANES * V, LANES).astype(compute_dtype)

    # Natural-layout view of the features: row g holds the 128 consecutive
    # (b,f) positions [g*128, (g+1)*128) with their V views.  Pure reshape of a
    # contiguous array -> no data movement.  Only ragged / tiny M pays a pad copy.
    feat2 = features.reshape(M, V)
    G = max(pl.cdiv(M, LANES), 8)            # keep the matmul M-dim >= 8
    Mp = G * LANES
    if Mp != M:
        feat2 = jnp.concatenate(
            [feat2, jnp.zeros((Mp - M, V), feat2.dtype)], axis=0
        )
    x = feat2.reshape(G, LANES * V)

    # Tile size along the group axis.
    if tile_groups is None:
        tg = _choose_tile_groups(G, LANES * V * features.dtype.itemsize)
    else:
        tg = int(tile_groups)
    tg = max(1, min(tg, G))
    if tg < G and tg % 8:
        tg = max(8, (tg // 8) * 8)

    grid = (pl.cdiv(G, tg),)

    out2d = pl.pallas_call(
        _ve_matmul_kernel,
        out_shape=jax.ShapeDtypeStruct((G, LANES), features.dtype),
        grid_spec=pltpu.PrefetchScalarGridSpec(
            num_scalar_prefetch=0,
            grid=grid,
            in_specs=[
                # Feature tile: contiguous HBM burst, fully lane-dense in VMEM.
                pl.BlockSpec((tg, LANES * V), lambda i: (i, 0)),
                # Resident weighted-scatter matrix (constant block index ->
                # DMA'd once, reused for every grid step).
                pl.BlockSpec((LANES * V, LANES), lambda i: (0, 0)),
            ],
            out_specs=pl.BlockSpec((tg, LANES), lambda i: (i, 0)),
        ),
        compiler_params=pltpu.CompilerParams(
            dimension_semantics=("parallel",),
            vmem_limit_bytes=48 * 1024 * 1024,
        ),
    )(x, P)

    return out2d.reshape(Mp)[:M].reshape(B, F)


def xavier_normal(key, shape):
    # torch.nn.init.xavier_normal_: std = sqrt(2 / (fan_in + fan_out)) with
    # fan_in = shape[1], fan_out = shape[0] for a 2-D (V, 1) tensor.
    fan_in, fan_out = shape[1], shape[0]
    std = math.sqrt(2.0 / (fan_in + fan_out))
    return std * jax.random.normal(key, shape, dtype=jnp.float32)


def _check(batch_size, feature_dim, num_views, key, tile_groups=None):
    k_feat, k_w = jax.random.split(key)
    features = jax.random.normal(
        k_feat, (batch_size, feature_dim, num_views), dtype=jnp.float32
    )
    weight = xavier_normal(k_w, (num_views, 1))

    out = jax.block_until_ready(
        view_ensemble(features, weight, tile_groups=tile_groups)
    )

    ref = jnp.einsum("bfv,vo->bf", features, weight)  # bmm + squeeze reference
    assert out.shape == (batch_size, feature_dim)
    err = float(jnp.max(jnp.abs(out - ref)))
    assert jnp.allclose(out, ref, atol=1e-4, rtol=1e-4), f"max abs err = {err}"


if __name__ == "__main__":
    key = jax.random.PRNGKey(0)
    k0, k1, k2, k3 = jax.random.split(key, 4)

    # M = B*F = 1024 -> 8 lane-groups, single grid step.
    _check(batch_size=4, feature_dim=256, num_views=12, key=k0)
    # Tiny case (M = 128): padded up to 8 groups, single full-extent block.
    _check(batch_size=2, feature_dim=64, num_views=12, key=k1)
    # Ragged case (M = 150 not a multiple of 128): exercises the pad path.
    _check(batch_size=3, feature_dim=50, num_views=12, key=k2)
    # Multi-tile case: G = 32 groups with 8-group tiles -> 4 "parallel" steps,
    # resident P reused across steps.
    _check(batch_size=8, feature_dim=512, num_views=12, key=k3, tile_groups=8)

    print("KERNEL_OK")
</pallas_src>

<mosaic_0001>
module attributes {stable_mosaic.version = 11 : i64} {
  func.func @_ve_matmul_kernel(%arg0: i32, %arg1: memref<8x1536xf32, #tpu.memory_space<vmem>>, %arg2: memref<1536x128xf32, #tpu.memory_space<vmem>>, %arg3: memref<8x128xf32, #tpu.memory_space<vmem>>) attributes {dimension_semantics = [#tpu.dimension_semantics<parallel>], iteration_bounds = array<i64: 1>, scalar_prefetch = 0 : i64, scratch_operands = 0 : i64, tpu.core_type = #tpu.core_type<tc>, window_params = [{transform_indices = @transform_0, window_bounds = array<i64: 8, 1536>}, {pipeline_mode = #tpu.pipeline_mode<synchronous>, transform_indices = @transform_1, window_bounds = array<i64: 1536, 128>}, {transform_indices = @transform_2, window_bounds = array<i64: 8, 128>}]} {
    %c0 = arith.constant 0 : index
    %c0_0 = arith.constant 0 : index
    %0 = vector.load %arg1[%c0, %c0_0] : memref<8x1536xf32, #tpu.memory_space<vmem>>, vector<8x1536xf32>
    %c0_1 = arith.constant 0 : index
    %c0_2 = arith.constant 0 : index
    %1 = vector.load %arg2[%c0_1, %c0_2] : memref<1536x128xf32, #tpu.memory_space<vmem>>, vector<1536x128xf32>
    %cst = arith.constant dense<0.000000e+00> : vector<8x128xf32>
    %2 = tpu.matmul %0, %1, %cst {dimension_numbers = #tpu.dot_dimension_numbers<[1], [0], [0], [1], [0, 0, 1, 1], [], []>} : vector<8x1536xf32>, vector<1536x128xf32>, vector<8x128xf32> -> vector<8x128xf32>
    %c0_3 = arith.constant 0 : index
    %c0_4 = arith.constant 0 : index
    %3 = vector.load %arg3[%c0_3, %c0_4] : memref<8x128xf32, #tpu.memory_space<vmem>>, vector<8x128xf32>
    tpu.vector_store %arg3[%c0_3, %c0_4], %2 {strides = array<i32>} : memref<8x128xf32, #tpu.memory_space<vmem>>, vector<8x128xf32>,
    return
  }
  func.func @transform_0(%arg0: i32) -> (i32, i32) {
    %c0_i32 = arith.constant 0 : i32
    %c0_i32_0 = arith.constant 0 : i32
    return %arg0, %c0_i32 : i32, i32
  }
  func.func @transform_1(%arg0: i32) -> (i32, i32) {
    %c0_i32 = arith.constant 0 : i32
    %c0_i32_0 = arith.constant 0 : i32
    %c0_i32_1 = arith.constant 0 : i32
    return %c0_i32, %c0_i32_0 : i32, i32
  }
  func.func @transform_2(%arg0: i32) -> (i32, i32) {
    %c0_i32 = arith.constant 0 : i32
    %c0_i32_0 = arith.constant 0 : i32
    return %arg0, %c0_i32 : i32, i32
  }
}

</mosaic_0001>

<llo_original>
// kernel: view_ensemble.1
$region0: #{view_ensemble.1}
  #allocation0 [shape = 'u32[]', space=smem, size = 0x4, offset = 0x4, fixed_abs, tag = 'smem constant byte address 0x4 - core index']
  #allocation1 [shape = 'u32[144,128]{1,0:T(1,128)}', space=vmem, size = 0x12000, scoped, tag = 'internal scratch']
  %s0 = inlined_call_operand.vmem [shape: f32[8,1536], index: 0, kind: input, shape index: {}]
  %s1 = inlined_call_operand.vmem [shape: f32[1536,128], index: 1, kind: input, shape index: {}]
  %s2 = inlined_call_operand.vmem [shape: f32[8,128], index: 2, kind: output, shape index: {}]
  %s3 = sld [smem:[#allocation0]]
  $region18: #{view_ensemble.1} parent=0
    _
  %s5 = ssub.s32 1, %s3
  %s6 = scalar_select 0, %s5, %s3
  // Predicated region
  $region2: #{view_ensemble.1} parent=0 // pred_check
    _
  $region3: #{view_ensemble.1} parent=0 // pred_check_branch
    %8 = sbr.rel (0) target = $region5
  $region4: #{view_ensemble.1} parent=0 // pred_region
    _
  $region5: #{view_ensemble.1} parent=0 // pred_fallthru
    _
  // Predicated region
  $region6: #{view_ensemble.1} parent=0 // pred_check
    _
  $region7: #{view_ensemble.1} parent=0 // pred_check_branch
    %10 = sbr.rel (0) target = $region9
  $region8: #{view_ensemble.1} parent=0 // pred_region
    _
  $region9: #{view_ensemble.1} parent=0 // pred_fallthru
    _
  %v11 = vld [vmem:[%s0] sm:$0xff]
  %v12 = vld [vmem:[%s0 + $0x8] sm:$0xff]
  %v13 = vld [vmem:[%s0 + $0x10] sm:$0xff]
  %v14 = vld [vmem:[%s0 + $0x18] sm:$0xff]
  %v15 = vld [vmem:[%s0 + $0x20] sm:$0xff]
  %v16 = vld [vmem:[%s0 + $0x28] sm:$0xff]
  %v17 = vld [vmem:[%s0 + $0x30] sm:$0xff]
  %v18 = vld [vmem:[%s0 + $0x38] sm:$0xff]
  %v19 = vld [vmem:[%s0 + $0x40] sm:$0xff]
  %v20 = vld [vmem:[%s0 + $0x48] sm:$0xff]
  %v21 = vld [vmem:[%s0 + $0x50] sm:$0xff]
  %v22 = vld [vmem:[%s0 + $0x58] sm:$0xff]
  %v23 = vld [vmem:[%s1] sm:$0xff]
  %v24 = vld [vmem:[%s1 + $0x8] sm:$0xff]
  %v25 = vld [vmem:[%s1 + $0x10] sm:$0xff]
  %v26 = vld [vmem:[%s1 + $0x18] sm:$0xff]
  %v27 = vld [vmem:[%s1 + $0x20] sm:$0xff]
  %v28 = vld [vmem:[%s1 + $0x28] sm:$0xff]
  %v29 = vld [vmem:[%s1 + $0x30] sm:$0xff]
  %v30 = vld [vmem:[%s1 + $0x38] sm:$0xff]
  %v31 = vld [vmem:[%s1 + $0x40] sm:$0xff]
  %v32 = vld [vmem:[%s1 + $0x48] sm:$0xff]
  %v33 = vld [vmem:[%s1 + $0x50] sm:$0xff]
  %v34 = vld [vmem:[%s1 + $0x58] sm:$0xff]
  %v35 = vld [vmem:[%s1 + $0x60] sm:$0xff]
  %v36 = vld [vmem:[%s1 + $0x68] sm:$0xff]
  %v37 = vld [vmem:[%s1 + $0x70] sm:$0xff]
  %v38 = vld [vmem:[%s1 + $0x78] sm:$0xff]
  %v39 = vld [vmem:[%s1 + $0x80] sm:$0xff]
  %v40 = vld [vmem:[%s1 + $0x88] sm:$0xff]
  %v41 = vld [vmem:[%s1 + $0x90] sm:$0xff]
  %v42 = vld [vmem:[%s1 + $0x98] sm:$0xff]
  %v43 = vld [vmem:[%s1 + $0xa0] sm:$0xff]
  %v44 = vld [vmem:[%s1 + $0xa8] sm:$0xff]
  %v45 = vld [vmem:[%s1 + $0xb0] sm:$0xff]
  %v46 = vld [vmem:[%s1 + $0xb8] sm:$0xff]
  %v47 = vld [vmem:[%s1 + $0xc0] sm:$0xff]
  %v48 = vld [vmem:[%s1 + $0xc8] sm:$0xff]
  %v49 = vld [vmem:[%s1 + $0xd0] sm:$0xff]
  %v50 = vld [vmem:[%s1 + $0xd8] sm:$0xff]
  %v51 = vld [vmem:[%s1 + $0xe0] sm:$0xff]
  %v52 = vld [vmem:[%s1 + $0xe8] sm:$0xff]
  %v53 = vld [vmem:[%s1 + $0xf0] sm:$0xff]
  %v54 = vld [vmem:[%s1 + $0xf8] sm:$0xff]
  %v55 = vld [vmem:[%s1 + $0x100] sm:$0xff]
  %v56 = vld [vmem:[%s1 + $0x108] sm:$0xff]
  %v57 = vld [vmem:[%s1 + $0x110] sm:$0xff]
  %v58 = vld [vmem:[%s1 + $0x118] sm:$0xff]
  %v59 = vld [vmem:[%s1 + $0x120] sm:$0xff]
  %v60 = vld [vmem:[%s1 + $0x128] sm:$0xff]
  %v61 = vld [vmem:[%s1 + $0x130] sm:$0xff]
  %v62 = vld [vmem:[%s1 + $0x138] sm:$0xff]
  %v63 = vld [vmem:[%s1 + $0x140] sm:$0xff]
  %v64 = vld [vmem:[%s1 + $0x148] sm:$0xff]
  %v65 = vld [vmem:[%s1 + $0x150] sm:$0xff]
  %v66 = vld [vmem:[%s1 + $0x158] sm:$0xff]
  %v67 = vld [vmem:[%s1 + $0x160] sm:$0xff]
  %v68 = vld [vmem:[%s1 + $0x168] sm:$0xff]
  %v69 = vld [vmem:[%s1 + $0x170] sm:$0xff]
  %v70 = vld [vmem:[%s1 + $0x178] sm:$0xff]
  %v71 = vld [vmem:[%s1 + $0x180] sm:$0xff]
  %v72 = vld [vmem:[%s1 + $0x188] sm:$0xff]
  %v73 = vld [vmem:[%s1 + $0x190] sm:$0xff]
  %v74 = vld [vmem:[%s1 + $0x198] sm:$0xff]
  %v75 = vld [vmem:[%s1 + $0x1a0] sm:$0xff]
  %v76 = vld [vmem:[%s1 + $0x1a8] sm:$0xff]
  %v77 = vld [vmem:[%s1 + $0x1b0] sm:$0xff]
  %v78 = vld [vmem:[%s1 + $0x1b8] sm:$0xff]
  %v79 = vld [vmem:[%s1 + $0x1c0] sm:$0xff]
  %v80 = vld [vmem:[%s1 + $0x1c8] sm:$0xff]
  %v81 = vld [vmem:[%s1 + $0x1d0] sm:$0xff]
  %v82 = vld [vmem:[%s1 + $0x1d8] sm:$0xff]
  %v83 = vld [vmem:[%s1 + $0x1e0] sm:$0xff]
  %v84 = vld [vmem:[%s1 + $0x1e8] sm:$0xff]
  %v85 = vld [vmem:[%s1 + $0x1f0] sm:$0xff]
  %v86 = vld [vmem:[%s1 + $0x1f8] sm:$0xff]
  %v87 = vld [vmem:[%s1 + $0x200] sm:$0xff]
  %v88 = vld [vmem:[%s1 + $0x208] sm:$0xff]
  %v89 = vld [vmem:[%s1 + $0x210] sm:$0xff]
  %v90 = vld [vmem:[%s1 + $0x218] sm:$0xff]
  %v91 = vld [vmem:[%s1 + $0x220] sm:$0xff]
  %v92 = vld [vmem:[%s1 + $0x228] sm:$0xff]
  %v93 = vld [vmem:[%s1 + $0x230] sm:$0xff]
  %v94 = vld [vmem:[%s1 + $0x238] sm:$0xff]
  %v95 = vld [vmem:[%s1 + $0x240] sm:$0xff]
  %v96 = vld [vmem:[%s1 + $0x248] sm:$0xff]
  %v97 = vld [vmem:[%s1 + $0x250] sm:$0xff]
  %v98 = vld [vmem:[%s1 + $0x258] sm:$0xff]
  %v99 = vld [vmem:[%s1 + $0x260] sm:$0xff]
  %v100 = vld [vmem:[%s1 + $0x268] sm:$0xff]
  %v101 = vld [vmem:[%s1 + $0x270] sm:$0xff]
  %v102 = vld [vmem:[%s1 + $0x278] sm:$0xff]
  %v103 = vld [vmem:[%s1 + $0x280] sm:$0xff]
  %v104 = vld [vmem:[%s1 + $0x288] sm:$0xff]
  %v105 = vld [vmem:[%s1 + $0x290] sm:$0xff]
  %v106 = vld [vmem:[%s1 + $0x298] sm:$0xff]
  %v107 = vld [vmem:[%s1 + $0x2a0] sm:$0xff]
  %v108 = vld [vmem:[%s1 + $0x2a8] sm:$0xff]
  %v109 = vld [vmem:[%s1 + $0x2b0] sm:$0xff]
  %v110 = vld [vmem:[%s1 + $0x2b8] sm:$0xff]
  %v111 = vld [vmem:[%s1 + $0x2c0] sm:$0xff]
  %v112 = vld [vmem:[%s1 + $0x2c8] sm:$0xff]
  %v113 = vld [vmem:[%s1 + $0x2d0] sm:$0xff]
  %v114 = vld [vmem:[%s1 + $0x2d8] sm:$0xff]
  %v115 = vld [vmem:[%s1 + $0x2e0] sm:$0xff]
  %v116 = vld [vmem:[%s1 + $0x2e8] sm:$0xff]
  %v117 = vld [vmem:[%s1 + $0x2f0] sm:$0xff]
  %v118 = vld [vmem:[%s1 + $0x2f8] sm:$0xff]
  %v119 = vld [vmem:[%s1 + $0x300] sm:$0xff]
  %v120 = vld [vmem:[%s1 + $0x308] sm:$0xff]
  %v121 = vld [vmem:[%s1 + $0x310] sm:$0xff]
  %v122 = vld [vmem:[%s1 + $0x318] sm:$0xff]
  %v123 = vld [vmem:[%s1 + $0x320] sm:$0xff]
  %v124 = vld [vmem:[%s1 + $0x328] sm:$0xff]
  %v125 = vld [vmem:[%s1 + $0x330] sm:$0xff]
  %v126 = vld [vmem:[%s1 + $0x338] sm:$0xff]
  %v127 = vld [vmem:[%s1 + $0x340] sm:$0xff]
  %v128 = vld [vmem:[%s1 + $0x348] sm:$0xff]
  %v129 = vld [vmem:[%s1 + $0x350] sm:$0xff]
  %v130 = vld [vmem:[%s1 + $0x358] sm:$0xff]
  %v131 = vld [vmem:[%s1 + $0x360] sm:$0xff]
  %v132 = vld [vmem:[%s1 + $0x368] sm:$0xff]
  %v133 = vld [vmem:[%s1 + $0x370] sm:$0xff]
  %v134 = vld [vmem:[%s1 + $0x378] sm:$0xff]
  %v135 = vld [vmem:[%s1 + $0x380] sm:$0xff]
  %v136 = vld [vmem:[%s1 + $0x388] sm:$0xff]
  %v137 = vld [vmem:[%s1 + $0x390] sm:$0xff]
  %v138 = vld [vmem:[%s1 + $0x398] sm:$0xff]
  %v139 = vld [vmem:[%s1 + $0x3a0] sm:$0xff]
  %v140 = vld [vmem:[%s1 + $0x3a8] sm:$0xff]
  %v141 = vld [vmem:[%s1 + $0x3b0] sm:$0xff]
  %v142 = vld [vmem:[%s1 + $0x3b8] sm:$0xff]
  %v143 = vld [vmem:[%s1 + $0x3c0] sm:$0xff]
  %v144 = vld [vmem:[%s1 + $0x3c8] sm:$0xff]
  %v145 = vld [vmem:[%s1 + $0x3d0] sm:$0xff]
  %v146 = vld [vmem:[%s1 + $0x3d8] sm:$0xff]
  %v147 = vld [vmem:[%s1 + $0x3e0] sm:$0xff]
  %v148 = vld [vmem:[%s1 + $0x3e8] sm:$0xff]
  %v149 = vld [vmem:[%s1 + $0x3f0] sm:$0xff]
  %v150 = vld [vmem:[%s1 + $0x3f8] sm:$0xff]
  %v151 = vld [vmem:[%s1 + $0x400] sm:$0xff]
  %v152 = vld [vmem:[%s1 + $0x408] sm:$0xff]
  %v153 = vld [vmem:[%s1 + $0x410] sm:$0xff]
  %v154 = vld [vmem:[%s1 + $0x418] sm:$0xff]
  %v155 = vld [vmem:[%s1 + $0x420] sm:$0xff]
  %v156 = vld [vmem:[%s1 + $0x428] sm:$0xff]
  %v157 = vld [vmem:[%s1 + $0x430] sm:$0xff]
  %v158 = vld [vmem:[%s1 + $0x438] sm:$0xff]
  %v159 = vld [vmem:[%s1 + $0x440] sm:$0xff]
  %v160 = vld [vmem:[%s1 + $0x448] sm:$0xff]
  %v161 = vld [vmem:[%s1 + $0x450] sm:$0xff]
  %v162 = vld [vmem:[%s1 + $0x458] sm:$0xff]
  %v163 = vld [vmem:[%s1 + $0x460] sm:$0xff]
  %v164 = vld [vmem:[%s1 + $0x468] sm:$0xff]
  %v165 = vld [vmem:[%s1 + $0x470] sm:$0xff]
  %v166 = vld [vmem:[%s1 + $0x478] sm:$0xff]
  %v167 = vld [vmem:[%s1 + $0x480] sm:$0xff]
  %v168 = vld [vmem:[%s1 + $0x488] sm:$0xff]
  %v169 = vld [vmem:[%s1 + $0x490] sm:$0xff]
  %v170 = vld [vmem:[%s1 + $0x498] sm:$0xff]
  %v171 = vld [vmem:[%s1 + $0x4a0] sm:$0xff]
  %v172 = vld [vmem:[%s1 + $0x4a8] sm:$0xff]
  %v173 = vld [vmem:[%s1 + $0x4b0] sm:$0xff]
  %v174 = vld [vmem:[%s1 + $0x4b8] sm:$0xff]
  %v175 = vld [vmem:[%s1 + $0x4c0] sm:$0xff]
  %v176 = vld [vmem:[%s1 + $0x4c8] sm:$0xff]
  %v177 = vld [vmem:[%s1 + $0x4d0] sm:$0xff]
  %v178 = vld [vmem:[%s1 + $0x4d8] sm:$0xff]
  %v179 = vld [vmem:[%s1 + $0x4e0] sm:$0xff]
  %v180 = vld [vmem:[%s1 + $0x4e8] sm:$0xff]
  %v181 = vld [vmem:[%s1 + $0x4f0] sm:$0xff]
  %v182 = vld [vmem:[%s1 + $0x4f8] sm:$0xff]
  %v183 = vld [vmem:[%s1 + $0x500] sm:$0xff]
  %v184 = vld [vmem:[%s1 + $0x508] sm:$0xff]
  %v185 = vld [vmem:[%s1 + $0x510] sm:$0xff]
  %v186 = vld [vmem:[%s1 + $0x518] sm:$0xff]
  %v187 = vld [vmem:[%s1 + $0x520] sm:$0xff]
  %v188 = vld [vmem:[%s1 + $0x528] sm:$0xff]
  %v189 = vld [vmem:[%s1 + $0x530] sm:$0xff]
  %v190 = vld [vmem:[%s1 + $0x538] sm:$0xff]
  %v191 = vld [vmem:[%s1 + $0x540] sm:$0xff]
  %v192 = vld [vmem:[%s1 + $0x548] sm:$0xff]
  %v193 = vld [vmem:[%s1 + $0x550] sm:$0xff]
  %v194 = vld [vmem:[%s1 + $0x558] sm:$0xff]
  %v195 = vld [vmem:[%s1 + $0x560] sm:$0xff]
  %v196 = vld [vmem:[%s1 + $0x568] sm:$0xff]
  %v197 = vld [vmem:[%s1 + $0x570] sm:$0xff]
  %v198 = vld [vmem:[%s1 + $0x578] sm:$0xff]
  %v199 = vld [vmem:[%s1 + $0x580] sm:$0xff]
  %v200 = vld [vmem:[%s1 + $0x588] sm:$0xff]
  %v201 = vld [vmem:[%s1 + $0x590] sm:$0xff]
  %v202 = vld [vmem:[%s1 + $0x598] sm:$0xff]
  %v203 = vld [vmem:[%s1 + $0x5a0] sm:$0xff]
  %v204 = vld [vmem:[%s1 + $0x5a8] sm:$0xff]
  %v205 = vld [vmem:[%s1 + $0x5b0] sm:$0xff]
  %v206 = vld [vmem:[%s1 + $0x5b8] sm:$0xff]
  %v207 = vld [vmem:[%s1 + $0x5c0] sm:$0xff]
  %v208 = vld [vmem:[%s1 + $0x5c8] sm:$0xff]
  %v209 = vld [vmem:[%s1 + $0x5d0] sm:$0xff]
  %v210 = vld [vmem:[%s1 + $0x5d8] sm:$0xff]
  %v211 = vld [vmem:[%s1 + $0x5e0] sm:$0xff]
  %v212 = vld [vmem:[%s1 + $0x5e8] sm:$0xff]
  %v213 = vld [vmem:[%s1 + $0x5f0] sm:$0xff]
  %v214 = vld [vmem:[%s1 + $0x5f8] sm:$0xff]
  %215 = vmatprep.subr.mxu0 0.0
  %216 = vmatpush1.msra.mxu0 %v38
  %217 = vmatprep.subr.mxu0 0.0
  %218 = vmatpush1.msra.mxu0 %v37
  %219 = vmatprep.subr.mxu0 0.0
  %220 = vmatpush1.msra.mxu0 %v36
  %221 = vmatprep.subr.mxu0 0.0
  %222 = vmatpush1.msra.mxu0 %v35
  %223 = vmatprep.subr.mxu0 0.0
  %224 = vmatpush1.msra.mxu0 %v34
  %225 = vmatprep.subr.mxu0 0.0
  %226 = vmatpush1.msra.mxu0 %v33
  %227 = vmatprep.subr.mxu0 0.0
  %228 = vmatpush1.msra.mxu0 %v32
  %229 = vmatprep.subr.mxu0 0.0
  %230 = vmatpush1.msra.mxu0 %v31
  %231 = vmatprep.subr.mxu0 0.0
  %232 = vmatpush1.msra.mxu0 %v30
  %233 = vmatprep.subr.mxu0 0.0
  %234 = vmatpush1.msra.mxu0 %v29
  %235 = vmatprep.subr.mxu0 0.0
  %236 = vmatpush1.msra.mxu0 %v28
  %237 = vmatprep.subr.mxu0 0.0
  %238 = vmatpush1.msra.mxu0 %v27
  %239 = vmatprep.subr.mxu0 0.0
  %240 = vmatpush1.msra.mxu0 %v26
  %241 = vmatprep.subr.mxu0 0.0
  %242 = vmatpush1.msra.mxu0 %v25
  %243 = vmatprep.subr.mxu0 0.0
  %244 = vmatpush1.msra.mxu0 %v24
  %245 = vmatprep.subr.mxu0 0.0
  %246 = vmatpush1.msra.mxu0 %v23
  %247 = vmatprep.subr.mxu0 0.0
  %248 = vmatpush2.msra.mxu0 %v54
  %249 = vmatprep.subr.mxu0 0.0
  %250 = vmatpush2.msra.mxu0 %v53
  %251 = vmatprep.subr.mxu0 0.0
  %252 = vmatpush2.msra.mxu0 %v52
  %253 = vmatprep.subr.mxu0 0.0
  %254 = vmatpush2.msra.mxu0 %v51
  %255 = vmatprep.subr.mxu0 0.0
  %256 = vmatpush2.msra.mxu0 %v50
  %257 = vmatprep.subr.mxu0 0.0
  %258 = vmatpush2.msra.mxu0 %v49
  %259 = vmatprep.subr.mxu0 0.0
  %260 = vmatpush2.msra.mxu0 %v48
  %261 = vmatprep.subr.mxu0 0.0
  %262 = vmatpush2.msra.mxu0 %v47
  %263 = vmatprep.subr.mxu0 0.0
  %264 = vmatpush2.msra.mxu0 %v46
  %265 = vmatprep.subr.mxu0 0.0
  %266 = vmatpush2.msra.mxu0 %v45
  %267 = vmatprep.subr.mxu0 0.0
  %268 = vmatpush2.msra.mxu0 %v44
  %269 = vmatprep.subr.mxu0 0.0
  %270 = vmatpush2.msra.mxu0 %v43
  %271 = vmatprep.subr.mxu0 0.0
  %272 = vmatpush2.msra.mxu0 %v42
  %273 = vmatprep.subr.mxu0 0.0
  %274 = vmatpush2.msra.mxu0 %v41
  %275 = vmatprep.subr.mxu0 0.0
  %276 = vmatpush2.msra.mxu0 %v40
  %277 = vmatprep.subr.mxu0 0.0
  %278 = vmatpush2.msra.mxu0 %v39
  %279 = vmatprep.mubr.f32.mxu0 %v12
  %280 = vmatmul.mubr.f32.gmra.mxu0 %v11
  %v281 = vpop.f32.mrf.mxu0
  %v282 = vadd.f32 0.0, %v281
  %v283 = vpop.f32.mrf.mxu0
  %284 = vdwg.mxu0
  %285 = vmatprep.subr.mxu0 0.0
  %286 = vmatpush1.msra.mxu0 %v70
  %287 = vmatprep.subr.mxu0 0.0
  %288 = vmatpush1.msra.mxu0 %v69
  %289 = vmatprep.subr.mxu0 0.0
  %290 = vmatpush1.msra.mxu0 %v68
  %291 = vmatprep.subr.mxu0 0.0
  %292 = vmatpush1.msra.mxu0 %v67
  %293 = vmatprep.subr.mxu0 0.0
  %294 = vmatpush1.msra.mxu0 %v66
  %295 = vmatprep.subr.mxu0 0.0
  %296 = vmatpush1.msra.mxu0 %v65
  %297 = vmatprep.subr.mxu0 0.0
  %298 = vmatpush1.msra.mxu0 %v64
  %299 = vmatprep.subr.mxu0 0.0
  %300 = vmatpush1.msra.mxu0 %v63
  %301 = vmatprep.subr.mxu0 0.0
  %302 = vmatpush1.msra.mxu0 %v62
  %303 = vmatprep.subr.mxu0 0.0
  %304 = vmatpush1.msra.mxu0 %v61
  %305 = vmatprep.subr.mxu0 0.0
  %306 = vmatpush1.msra.mxu0 %v60
  %307 = vmatprep.subr.mxu0 0.0
  %308 = vmatpush1.msra.mxu0 %v59
  %309 = vmatprep.subr.mxu0 0.0
  %310 = vmatpush1.msra.mxu0 %v58
  %311 = vmatprep.subr.mxu0 0.0
  %312 = vmatpush1.msra.mxu0 %v57
  %313 = vmatprep.subr.mxu0 0.0
  %314 = vmatpush1.msra.mxu0 %v56
  %315 = vmatprep.subr.mxu0 0.0
  %316 = vmatpush1.msra.mxu0 %v55
  %317 = vmatprep.subr.mxu0 0.0
  %318 = vmatpush2.msra.mxu0 %v86
  %319 = vmatprep.subr.mxu0 0.0
  %320 = vmatpush2.msra.mxu0 %v85
  %321 = vmatprep.subr.mxu0 0.0
  %322 = vmatpush2.msra.mxu0 %v84
  %323 = vmatprep.subr.mxu0 0.0
  %324 = vmatpush2.msra.mxu0 %v83
  %325 = vmatprep.subr.mxu0 0.0
  %326 = vmatpush2.msra.mxu0 %v82
  %327 = vmatprep.subr.mxu0 0.0
  %328 = vmatpush2.msra.mxu0 %v81
  %329 = vmatprep.subr.mxu0 0.0
  %330 = vmatpush2.msra.mxu0 %v80
  %331 = vmatprep.subr.mxu0 0.0
  %332 = vmatpush2.msra.mxu0 %v79
  %333 = vmatprep.subr.mxu0 0.0
  %334 = vmatpush2.msra.mxu0 %v78
  %335 = vmatprep.subr.mxu0 0.0
  %336 = vmatpush2.msra.mxu0 %v77
  %337 = vmatprep.subr.mxu0 0.0
  %338 = vmatpush2.msra.mxu0 %v76
  %339 = vmatprep.subr.mxu0 0.0
  %340 = vmatpush2.msra.mxu0 %v75
  %341 = vmatprep.subr.mxu0 0.0
  %342 = vmatpush2.msra.mxu0 %v74
  %343 = vmatprep.subr.mxu0 0.0
  %344 = vmatpush2.msra.mxu0 %v73
  %345 = vmatprep.subr.mxu0 0.0
  %346 = vmatpush2.msra.mxu0 %v72
  %347 = vmatprep.subr.mxu0 0.0
  %348 = vmatpush2.msra.mxu0 %v71
  %349 = vmatprep.mubr.f32.mxu0 %v14
  %350 = vmatmul.mubr.f32.gmra.mxu0 %v13
  %v351 = vpop.f32.mrf.mxu0
  %v352 = vadd.f32 %v282, %v351
  %v353 = vpop.f32.mrf.mxu0
  %354 = vdwg.mxu0
  %355 = vmatprep.subr.mxu0 0.0
  %356 = vmatpush1.msra.mxu0 %v102
  %357 = vmatprep.subr.mxu0 0.0
  %358 = vmatpush1.msra.mxu0 %v101
  %359 = vmatprep.subr.mxu0 0.0
  %360 = vmatpush1.msra.mxu0 %v100
  %361 = vmatprep.subr.mxu0 0.0
  %362 = vmatpush1.msra.mxu0 %v99
  %363 = vmatprep.subr.mxu0 0.0
  %364 = vmatpush1.msra.mxu0 %v98
  %365 = vmatprep.subr.mxu0 0.0
  %366 = vmatpush1.msra.mxu0 %v97
  %367 = vmatprep.subr.mxu0 0.0
  %368 = vmatpush1.msra.mxu0 %v96
  %369 = vmatprep.subr.mxu0 0.0
  %370 = vmatpush1.msra.mxu0 %v95
  %371 = vmatprep.subr.mxu0 0.0
  %372 = vmatpush1.msra.mxu0 %v94
  %373 = vmatprep.subr.mxu0 0.0
  %374 = vmatpush1.msra.mxu0 %v93
  %375 = vmatprep.subr.mxu0 0.0
  %376 = vmatpush1.msra.mxu0 %v92
  %377 = vmatprep.subr.mxu0 0.0
  %378 = vmatpush1.msra.mxu0 %v91
  %379 = vmatprep.subr.mxu0 0.0
  %380 = vmatpush1.msra.mxu0 %v90
  %381 = vmatprep.subr.mxu0 0.0
  %382 = vmatpush1.msra.mxu0 %v89
  %383 = vmatprep.subr.mxu0 0.0
  %384 = vmatpush1.msra.mxu0 %v88
  %385 = vmatprep.subr.mxu0 0.0
  %386 = vmatpush1.msra.mxu0 %v87
  %387 = vmatprep.subr.mxu0 0.0
  %388 = vmatpush2.msra.mxu0 %v118
  %389 = vmatprep.subr.mxu0 0.0
  %390 = vmatpush2.msra.mxu0 %v117
  %391 = vmatprep.subr.mxu0 0.0
  %392 = vmatpush2.msra.mxu0 %v116
  %393 = vmatprep.subr.mxu0 0.0
  %394 = vmatpush2.msra.mxu0 %v115
  %395 = vmatprep.subr.mxu0 0.0
  %396 = vmatpush2.msra.mxu0 %v114
  %397 = vmatprep.subr.mxu0 0.0
  %398 = vmatpush2.msra.mxu0 %v113
  %399 = vmatprep.subr.mxu0 0.0
  %400 = vmatpush2.msra.mxu0 %v112
  %401 = vmatprep.subr.mxu0 0.0
  %402 = vmatpush2.msra.mxu0 %v111
  %403 = vmatprep.subr.mxu0 0.0
  %404 = vmatpush2.msra.mxu0 %v110
  %405 = vmatprep.subr.mxu0 0.0
  %406 = vmatpush2.msra.mxu0 %v109
  %407 = vmatprep.subr.mxu0 0.0
  %408 = vmatpush2.msra.mxu0 %v108
  %409 = vmatprep.subr.mxu0 0.0
  %410 = vmatpush2.msra.mxu0 %v107
  %411 = vmatprep.subr.mxu0 0.0
  %412 = vmatpush2.msra.mxu0 %v106
  %413 = vmatprep.subr.mxu0 0.0
  %414 = vmatpush2.msra.mxu0 %v105
  %415 = vmatprep.subr.mxu0 0.0
  %416 = vmatpush2.msra.mxu0 %v104
  %417 = vmatprep.subr.mxu0 0.0
  %418 = vmatpush2.msra.mxu0 %v103
  %419 = vmatprep.mubr.f32.mxu0 %v16
  %420 = vmatmul.mubr.f32.gmra.mxu0 %v15
  %v421 = vpop.f32.mrf.mxu0
  %v422 = vadd.f32 %v352, %v421
  %v423 = vpop.f32.mrf.mxu0
  %424 = vdwg.mxu0
  %425 = vmatprep.subr.mxu0 0.0
  %426 = vmatpush1.msra.mxu0 %v134
  %427 = vmatprep.subr.mxu0 0.0
  %428 = vmatpush1.msra.mxu0 %v133
  %429 = vmatprep.subr.mxu0 0.0
  %430 = vmatpush1.msra.mxu0 %v132
  %431 = vmatprep.subr.mxu0 0.0
  %432 = vmatpush1.msra.mxu0 %v131
  %433 = vmatprep.subr.mxu0 0.0
  %434 = vmatpush1.msra.mxu0 %v130
  %435 = vmatprep.subr.mxu0 0.0
  %436 = vmatpush1.msra.mxu0 %v129
  %437 = vmatprep.subr.mxu0 0.0
  %438 = vmatpush1.msra.mxu0 %v128
  %439 = vmatprep.subr.mxu0 0.0
  %440 = vmatpush1.msra.mxu0 %v127
  %441 = vmatprep.subr.mxu0 0.0
  %442 = vmatpush1.msra.mxu0 %v126
  %443 = vmatprep.subr.mxu0 0.0
  %444 = vmatpush1.msra.mxu0 %v125
  %445 = vmatprep.subr.mxu0 0.0
  %446 = vmatpush1.msra.mxu0 %v124
  %447 = vmatprep.subr.mxu0 0.0
  %448 = vmatpush1.msra.mxu0 %v123
  %449 = vmatprep.subr.mxu0 0.0
  %450 = vmatpush1.msra.mxu0 %v122
  %451 = vmatprep.subr.mxu0 0.0
  %452 = vmatpush1.msra.mxu0 %v121
  %453 = vmatprep.subr.mxu0 0.0
  %454 = vmatpush1.msra.mxu0 %v120
  %455 = vmatprep.subr.mxu0 0.0
  %456 = vmatpush1.msra.mxu0 %v119
  %457 = vmatprep.subr.mxu0 0.0
  %458 = vmatpush2.msra.mxu0 %v150
  %459 = vmatprep.subr.mxu0 0.0
  %460 = vmatpush2.msra.mxu0 %v149
  %461 = vmatprep.subr.mxu0 0.0
  %462 = vmatpush2.msra.mxu0 %v148
  %463 = vmatprep.subr.mxu0 0.0
  %464 = vmatpush2.msra.mxu0 %v147
  %465 = vmatprep.subr.mxu0 0.0
  %466 = vmatpush2.msra.mxu0 %v146
  %467 = vmatprep.subr.mxu0 0.0
  %468 = vmatpush2.msra.mxu0 %v145
  %469 = vmatprep.subr.mxu0 0.0
  %470 = vmatpush2.msra.mxu0 %v144
  %471 = vmatprep.subr.mxu0 0.0
  %472 = vmatpush2.msra.mxu0 %v143
  %473 = vmatprep.subr.mxu0 0.0
  %474 = vmatpush2.msra.mxu0 %v142
  %475 = vmatprep.subr.mxu0 0.0
  %476 = vmatpush2.msra.mxu0 %v141
  %477 = vmatprep.subr.mxu0 0.0
  %478 = vmatpush2.msra.mxu0 %v140
  %479 = vmatprep.subr.mxu0 0.0
  %480 = vmatpush2.msra.mxu0 %v139
  %481 = vmatprep.subr.mxu0 0.0
  %482 = vmatpush2.msra.mxu0 %v138
  %483 = vmatprep.subr.mxu0 0.0
  %484 = vmatpush2.msra.mxu0 %v137
  %485 = vmatprep.subr.mxu0 0.0
  %486 = vmatpush2.msra.mxu0 %v136
  %487 = vmatprep.subr.mxu0 0.0
  %488 = vmatpush2.msra.mxu0 %v135
  %489 = vmatprep.mubr.f32.mxu0 %v18
  %490 = vmatmul.mubr.f32.gmra.mxu0 %v17
  %v491 = vpop.f32.mrf.mxu0
  %v492 = vadd.f32 %v422, %v491
  %v493 = vpop.f32.mrf.mxu0
  %494 = vdwg.mxu0
  %495 = vmatprep.subr.mxu0 0.0
  %496 = vmatpush1.msra.mxu0 %v166
  %497 = vmatprep.subr.mxu0 0.0
  %498 = vmatpush1.msra.mxu0 %v165
  %499 = vmatprep.subr.mxu0 0.0
  %500 = vmatpush1.msra.mxu0 %v164
  %501 = vmatprep.subr.mxu0 0.0
  %502 = vmatpush1.msra.mxu0 %v163
  %503 = vmatprep.subr.mxu0 0.0
  %504 = vmatpush1.msra.mxu0 %v162
  %505 = vmatprep.subr.mxu0 0.0
  %506 = vmatpush1.msra.mxu0 %v161
  %507 = vmatprep.subr.mxu0 0.0
  %508 = vmatpush1.msra.mxu0 %v160
  %509 = vmatprep.subr.mxu0 0.0
  %510 = vmatpush1.msra.mxu0 %v159
  %511 = vmatprep.subr.mxu0 0.0
  %512 = vmatpush1.msra.mxu0 %v158
  %513 = vmatprep.subr.mxu0 0.0
  %514 = vmatpush1.msra.mxu0 %v157
  %515 = vmatprep.subr.mxu0 0.0
  %516 = vmatpush1.msra.mxu0 %v156
  %517 = vmatprep.subr.mxu0 0.0
  %518 = vmatpush1.msra.mxu0 %v155
  %519 = vmatprep.subr.mxu0 0.0
  %520 = vmatpush1.msra.mxu0 %v154
  %521 = vmatprep.subr.mxu0 0.0
  %522 = vmatpush1.msra.mxu0 %v153
  %523 = vmatprep.subr.mxu0 0.0
  %524 = vmatpush1.msra.mxu0 %v152
  %525 = vmatprep.subr.mxu0 0.0
  %526 = vmatpush1.msra.mxu0 %v151
  %527 = vmatprep.subr.mxu0 0.0
  %528 = vmatpush2.msra.mxu0 %v182
  %529 = vmatprep.subr.mxu0 0.0
  %530 = vmatpush2.msra.mxu0 %v181
  %531 = vmatprep.subr.mxu0 0.0
  %532 = vmatpush2.msra.mxu0 %v180
  %533 = vmatprep.subr.mxu0 0.0
  %534 = vmatpush2.msra.mxu0 %v179
  %535 = vmatprep.subr.mxu0 0.0
  %536 = vmatpush2.msra.mxu0 %v178
  %537 = vmatprep.subr.mxu0 0.0
  %538 = vmatpush2.msra.mxu0 %v177
  %539 = vmatprep.subr.mxu0 0.0
  %540 = vmatpush2.msra.mxu0 %v176
  %541 = vmatprep.subr.mxu0 0.0
  %542 = vmatpush2.msra.mxu0 %v175
  %543 = vmatprep.subr.mxu0 0.0
  %544 = vmatpush2.msra.mxu0 %v174
  %545 = vmatprep.subr.mxu0 0.0
  %546 = vmatpush2.msra.mxu0 %v173
  %547 = vmatprep.subr.mxu0 0.0
  %548 = vmatpush2.msra.mxu0 %v172
  %549 = vmatprep.subr.mxu0 0.0
  %550 = vmatpush2.msra.mxu0 %v171
  %551 = vmatprep.subr.mxu0 0.0
  %552 = vmatpush2.msra.mxu0 %v170
  %553 = vmatprep.subr.mxu0 0.0
  %554 = vmatpush2.msra.mxu0 %v169
  %555 = vmatprep.subr.mxu0 0.0
  %556 = vmatpush2.msra.mxu0 %v168
  %557 = vmatprep.subr.mxu0 0.0
  %558 = vmatpush2.msra.mxu0 %v167
  %559 = vmatprep.mubr.f32.mxu0 %v20
  %560 = vmatmul.mubr.f32.gmra.mxu0 %v19
  %v561 = vpop.f32.mrf.mxu0
  %v562 = vadd.f32 %v492, %v561
  %v563 = vpop.f32.mrf.mxu0
  %564 = vdwg.mxu0
  %565 = vmatprep.subr.mxu0 0.0
  %566 = vmatpush1.msra.mxu0 %v198
  %567 = vmatprep.subr.mxu0 0.0
  %568 = vmatpush1.msra.mxu0 %v197
  %569 = vmatprep.subr.mxu0 0.0
  %570 = vmatpush1.msra.mxu0 %v196
  %571 = vmatprep.subr.mxu0 0.0
  %572 = vmatpush1.msra.mxu0 %v195
  %573 = vmatprep.subr.mxu0 0.0
  %574 = vmatpush1.msra.mxu0 %v194
  %575 = vmatprep.subr.mxu0 0.0
  %576 = vmatpush1.msra.mxu0 %v193
  %577 = vmatprep.subr.mxu0 0.0
  %578 = vmatpush1.msra.mxu0 %v192
  %579 = vmatprep.subr.mxu0 0.0
  %580 = vmatpush1.msra.mxu0 %v191
  %581 = vmatprep.subr.mxu0 0.0
  %582 = vmatpush1.msra.mxu0 %v190
  %583 = vmatprep.subr.mxu0 0.0
  %584 = vmatpush1.msra.mxu0 %v189
  %585 = vmatprep.subr.mxu0 0.0
  %586 = vmatpush1.msra.mxu0 %v188
  %587 = vmatprep.subr.mxu0 0.0
  %588 = vmatpush1.msra.mxu0 %v187
  %589 = vmatprep.subr.mxu0 0.0
  %590 = vmatpush1.msra.mxu0 %v186
  %591 = vmatprep.subr.mxu0 0.0
  %592 = vmatpush1.msra.mxu0 %v185
  %593 = vmatprep.subr.mxu0 0.0
  %594 = vmatpush1.msra.mxu0 %v184
  %595 = vmatprep.subr.mxu0 0.0
  %596 = vmatpush1.msra.mxu0 %v183
  %597 = vmatprep.subr.mxu0 0.0
  %598 = vmatpush2.msra.mxu0 %v214
  %599 = vmatprep.subr.mxu0 0.0
  %600 = vmatpush2.msra.mxu0 %v213
  %601 = vmatprep.subr.mxu0 0.0
  %602 = vmatpush2.msra.mxu0 %v212
  %603 = vmatprep.subr.mxu0 0.0
  %604 = vmatpush2.msra.mxu0 %v211
  %605 = vmatprep.subr.mxu0 0.0
  %606 = vmatpush2.msra.mxu0 %v210
  %607 = vmatprep.subr.mxu0 0.0
  %608 = vmatpush2.msra.mxu0 %v209
  %609 = vmatprep.subr.mxu0 0.0
  %610 = vmatpush2.msra.mxu0 %v208
  %611 = vmatprep.subr.mxu0 0.0
  %612 = vmatpush2.msra.mxu0 %v207
  %613 = vmatprep.subr.mxu0 0.0
  %614 = vmatpush2.msra.mxu0 %v206
  %615 = vmatprep.subr.mxu0 0.0
  %616 = vmatpush2.msra.mxu0 %v205
  %617 = vmatprep.subr.mxu0 0.0
  %618 = vmatpush2.msra.mxu0 %v204
  %619 = vmatprep.subr.mxu0 0.0
  %620 = vmatpush2.msra.mxu0 %v203
  %621 = vmatprep.subr.mxu0 0.0
  %622 = vmatpush2.msra.mxu0 %v202
  %623 = vmatprep.subr.mxu0 0.0
  %624 = vmatpush2.msra.mxu0 %v201
  %625 = vmatprep.subr.mxu0 0.0
  %626 = vmatpush2.msra.mxu0 %v200
  %627 = vmatprep.subr.mxu0 0.0
  %628 = vmatpush2.msra.mxu0 %v199
  %629 = vmatprep.mubr.f32.mxu0 %v22
  %630 = vmatmul.mubr.f32.gmra.mxu0 %v21
  %v631 = vpop.f32.mrf.mxu0
  %v632 = vadd.f32 %v562, %v631
  %v633 = vpop.f32.mrf.mxu0
  %634 = vdwg.mxu0
  %635 = vst [vmem:[%s2] sm:$0xff] %v632
  // Predicated region
  $region10: #{view_ensemble.1} parent=0 // pred_check
    _
  $region11: #{view_ensemble.1} parent=0 // pred_check_branch
    %637 = sbr.rel (0) target = $region13
  $region12: #{view_ensemble.1} parent=0 // pred_region
    _
  $region13: #{view_ensemble.1} parent=0 // pred_fallthru
    _
  // Predicated region
  $region14: #{view_ensemble.1} parent=0 // pred_check
    _
  $region15: #{view_ensemble.1} parent=0 // pred_check_branch
    %639 = sbr.rel (0) target = $region17
  $region16: #{view_ensemble.1} parent=0 // pred_region
    _
  $region17: #{view_ensemble.1} parent=0 // pred_fallthru
    _

</llo_original>
